<compile_context>
chip_gen: v6e
topology: v6e:2x2x1
jax: 0.10.0
libtpu: 0.0.40
codegen_flags: <defaults>
</compile_context>

<pallas_src>
import jax
import jax.numpy as jnp
from jax.experimental import pallas as pl
from jax.experimental.pallas import tpu as pltpu

LANE = 128  # TPU lane width


def mlp_kernel(x_ref, w1c_ref, avg_ref, gamma_ref, beta_ref, w2_ref, w3_ref,
               o_ref):
    # x_ref: (T, 128) f32 -- each 128-lane row packs 4 original 32-feature
    # rows.  Weights are 128x128 block-diagonal, so packed `x @ Wb` equals the
    # per-row `x32 @ W`.  Cast to bf16 in-kernel (VPU, hidden under the DMA).
    x = x_ref[...].astype(jnp.bfloat16)

    # --- Linear(in->hid) with the grouped-LN mean subtraction folded in:
    #     d = x @ (W1 (I - 11^T/32))  ==  h - mean_group(h)      (bf16 -> f32)
    d = jnp.dot(x, w1c_ref[...], preferred_element_type=jnp.float32)

    # --- grouped LayerNorm: biased variance via block-diag averaging matmul
    #     (bf16 operands; 1/32 is exact in bf16), f32 accumulation.
    var = jnp.dot((d * d).astype(jnp.bfloat16), avg_ref[...],
                  preferred_element_type=jnp.float32)
    h = d * jax.lax.rsqrt(var + 1e-5)
    h = h * gamma_ref[...] + beta_ref[...]

    # --- ReLU (+ Dropout as identity, eval mode) ---
    h = jnp.maximum(h, 0.0)

    # --- Linear(hid->hid), ReLU (+ Dropout identity) ---
    h = jnp.maximum(
        jnp.dot(h.astype(jnp.bfloat16), w2_ref[...],
                preferred_element_type=jnp.float32), 0.0)

    # --- ResidualBlock: h + Dropout(ReLU(Linear(h))) ---
    res = jnp.maximum(
        jnp.dot(h.astype(jnp.bfloat16), w3_ref[...],
                preferred_element_type=jnp.float32), 0.0)

    o_ref[...] = (h + res).astype(o_ref.dtype)


def prepare_mlp_params(w1, gamma, beta, w2, w3):
    """One-time packing of parameters into 128x128 block-diagonal operators.

    Call at init / after a param update, NOT on the forward hot path.
    Linear weights are stored (in, out) so the forward is `x @ W`.
    """
    d = w1.shape[0]
    assert LANE % d == 0
    pack = LANE // d
    eye = jnp.eye(pack, dtype=jnp.float32)
    # Fold the grouped-LN mean subtraction into W1: W1c = W1 @ (I - 11^T/d).
    center = jnp.eye(d, dtype=jnp.float32) - jnp.full((d, d), 1.0 / d,
                                                      jnp.float32)
    w1c = w1.astype(jnp.float32) @ center
    w1c_b = jnp.kron(eye, w1c).astype(jnp.bfloat16)
    w2_b = jnp.kron(eye, w2.astype(jnp.float32)).astype(jnp.bfloat16)
    w3_b = jnp.kron(eye, w3.astype(jnp.float32)).astype(jnp.bfloat16)
    avg_b = jnp.kron(eye, jnp.full((d, d), 1.0 / d, jnp.float32)).astype(
        jnp.bfloat16)
    gamma_t = jnp.tile(gamma.astype(jnp.float32), pack).reshape(1, LANE)
    beta_t = jnp.tile(beta.astype(jnp.float32), pack).reshape(1, LANE)
    return (w1c_b, avg_b, gamma_t, beta_t, w2_b, w3_b)


def mlp_forward(x, packed_params, *, max_packed_tile=1024,
                out_dtype=jnp.float32):
    """x: (B, 32) f32; packed_params from prepare_mlp_params()."""
    w1c_b, avg_b, gamma_t, beta_t, w2_b, w3_b = packed_params
    B, d = x.shape
    assert LANE % d == 0
    pack = LANE // d  # 4 original rows per 128-lane packed row

    # Tile selection: %8 sublanes, scales with B, and keeps an EVEN grid of
    # >= 2 "parallel" steps whenever possible (v7x 2-TC megacore sharding).
    bp_needed = pl.cdiv(B, pack)
    bp8 = max(8, ((bp_needed + 7) // 8) * 8)
    if bp8 <= 8:
        tile, steps = bp8, 1
    else:
        tile = min(max_packed_tile, ((bp8 + 15) // 16) * 8)  # ~bp8/2, %8 == 0
        steps = pl.cdiv(bp8, tile)
        if steps % 2:
            steps += 1

    rows_pad = steps * tile * pack
    if rows_pad != B:
        # Zero rows are LN-safe (var=0 + eps) and sliced away below; only hit
        # when B does not already fill the grid exactly.
        x = jnp.pad(x, ((0, rows_pad - B), (0, 0)))
    bp = rows_pad // pack
    xp = x.reshape(bp, LANE)  # free row-major repack; stays f32 into the kernel

    out = pl.pallas_call(
        mlp_kernel,
        out_shape=jax.ShapeDtypeStruct((bp, LANE), out_dtype),
        grid_spec=pltpu.PrefetchScalarGridSpec(
            num_scalar_prefetch=0,
            grid=(steps,),
            in_specs=[
                pl.BlockSpec((tile, LANE), lambda i: (i, 0)),  # x packed (f32)
                pl.BlockSpec((LANE, LANE), lambda i: (0, 0)),  # W1c blkdiag
                pl.BlockSpec((LANE, LANE), lambda i: (0, 0)),  # LN avg blkdiag
                pl.BlockSpec((1, LANE), lambda i: (0, 0)),     # gamma tiled
                pl.BlockSpec((1, LANE), lambda i: (0, 0)),     # beta tiled
                pl.BlockSpec((LANE, LANE), lambda i: (0, 0)),  # W2 blkdiag
                pl.BlockSpec((LANE, LANE), lambda i: (0, 0)),  # W3 blkdiag
            ],
            out_specs=pl.BlockSpec((tile, LANE), lambda i: (i, 0)),
        ),
        compiler_params=pltpu.CompilerParams(
            dimension_semantics=("parallel",)),
    )(xp, w1c_b, avg_b, gamma_t, beta_t, w2_b, w3_b)

    # Free row-major reshape back to (B, 32); drop padding rows.
    return out.reshape(rows_pad, d)[:B]


def reference_forward(x, w1, gamma, beta, w2, w3):
    h = x @ w1
    mean = h.mean(-1, keepdims=True)
    var = ((h - mean) ** 2).mean(-1, keepdims=True)
    h = (h - mean) / jnp.sqrt(var + 1e-5) * gamma + beta
    h = jnp.maximum(h, 0.0)
    h = jnp.maximum(h @ w2, 0.0)
    return h + jnp.maximum(h @ w3, 0.0)


if __name__ == "__main__":
    D = 32  # input_size == hidden_size == final_size

    key = jax.random.PRNGKey(0)
    kx, k1, k2, k3 = jax.random.split(key, 4)

    # Deterministic parameter init (kaiming-uniform-like scale); weights are
    # stored (in, out) so the forward is `x @ W`.
    bound = 1.0 / (D ** 0.5)
    w1 = jax.random.uniform(k1, (D, D), jnp.float32, -bound, bound)
    w2 = jax.random.uniform(k2, (D, D), jnp.float32, -bound, bound)
    w3 = jax.random.uniform(k3, (D, D), jnp.float32, -bound, bound)
    gamma = jnp.ones((D,), jnp.float32)  # LayerNorm weight init
    beta = jnp.zeros((D,), jnp.float32)  # LayerNorm bias init

    # One-time operator packing -- hoisted off the per-forward hot path.
    params = jax.tree_util.tree_map(
        jax.block_until_ready, prepare_mlp_params(w1, gamma, beta, w2, w3))

    fwd = jax.jit(mlp_forward)

    # Main case: small batch that still exercises a 2-step "parallel" grid.
    B = 256
    x = jax.random.normal(kx, (B, D), dtype=jnp.float32)
    out = jax.block_until_ready(fwd(x, params))
    ref = reference_forward(x, w1, gamma, beta, w2, w3)
    assert out.shape == (B, D)
    assert bool(jnp.all(jnp.isfinite(out)))
    # bf16 MXU operands (f32 accumulation) vs. the pure-f32 reference.
    assert jnp.allclose(out, ref, atol=5e-2, rtol=5e-2), float(
        jnp.max(jnp.abs(out - ref)))

    # Ragged case: batch not a multiple of the tile footprint (pad path).
    B2 = 50
    x2 = jax.random.normal(kx, (B2, D), dtype=jnp.float32)
    out2 = jax.block_until_ready(fwd(x2, params))
    ref2 = reference_forward(x2, w1, gamma, beta, w2, w3)
    assert out2.shape == (B2, D)
    assert bool(jnp.all(jnp.isfinite(out2)))
    assert jnp.allclose(out2, ref2, atol=5e-2, rtol=5e-2), float(
        jnp.max(jnp.abs(out2 - ref2)))

    print("KERNEL_OK")
</pallas_src>

<mosaic_0001>
module attributes {stable_mosaic.version = 11 : i64} {
  func.func @mlp_kernel(%arg0: i32, %arg1: memref<32x128xf32, #tpu.memory_space<vmem>>, %arg2: memref<128x128xbf16, #tpu.memory_space<vmem>>, %arg3: memref<128x128xbf16, #tpu.memory_space<vmem>>, %arg4: memref<1x128xf32, #tpu.memory_space<vmem>>, %arg5: memref<1x128xf32, #tpu.memory_space<vmem>>, %arg6: memref<128x128xbf16, #tpu.memory_space<vmem>>, %arg7: memref<128x128xbf16, #tpu.memory_space<vmem>>, %arg8: memref<32x128xf32, #tpu.memory_space<vmem>>) attributes {dimension_semantics = [#tpu.dimension_semantics<parallel>], iteration_bounds = array<i64: 2>, scalar_prefetch = 0 : i64, scratch_operands = 0 : i64, tpu.core_type = #tpu.core_type<tc>, window_params = [{transform_indices = @transform_0, window_bounds = array<i64: 32, 128>}, {pipeline_mode = #tpu.pipeline_mode<synchronous>, transform_indices = @transform_1, window_bounds = array<i64: 128, 128>}, {pipeline_mode = #tpu.pipeline_mode<synchronous>, transform_indices = @transform_2, window_bounds = array<i64: 128, 128>}, {pipeline_mode = #tpu.pipeline_mode<synchronous>, transform_indices = @transform_3, window_bounds = array<i64: 1, 128>}, {pipeline_mode = #tpu.pipeline_mode<synchronous>, transform_indices = @transform_4, window_bounds = array<i64: 1, 128>}, {pipeline_mode = #tpu.pipeline_mode<synchronous>, transform_indices = @transform_5, window_bounds = array<i64: 128, 128>}, {pipeline_mode = #tpu.pipeline_mode<synchronous>, transform_indices = @transform_6, window_bounds = array<i64: 128, 128>}, {transform_indices = @transform_7, window_bounds = array<i64: 32, 128>}]} {
    %c0 = arith.constant 0 : index
    %c0_0 = arith.constant 0 : index
    %0 = vector.load %arg1[%c0, %c0_0] : memref<32x128xf32, #tpu.memory_space<vmem>>, vector<32x128xf32>
    %1 = arith.truncf %0 : vector<32x128xf32> to vector<32x128xbf16>
    %c0_1 = arith.constant 0 : index
    %c0_2 = arith.constant 0 : index
    %2 = vector.load %arg2[%c0_1, %c0_2] : memref<128x128xbf16, #tpu.memory_space<vmem>>, vector<128x128xbf16>
    %cst = arith.constant dense<0.000000e+00> : vector<32x128xf32>
    %3 = tpu.matmul %1, %2, %cst {dimension_numbers = #tpu.dot_dimension_numbers<[1], [0], [0], [1], [0, 0, 1, 1], [], []>} : vector<32x128xbf16>, vector<128x128xbf16>, vector<32x128xf32> -> vector<32x128xf32>
    %4 = arith.mulf %3, %3 : vector<32x128xf32>
    %5 = arith.truncf %4 : vector<32x128xf32> to vector<32x128xbf16>
    %c0_3 = arith.constant 0 : index
    %c0_4 = arith.constant 0 : index
    %6 = vector.load %arg3[%c0_3, %c0_4] : memref<128x128xbf16, #tpu.memory_space<vmem>>, vector<128x128xbf16>
    %cst_5 = arith.constant dense<0.000000e+00> : vector<32x128xf32>
    %7 = tpu.matmul %5, %6, %cst_5 {dimension_numbers = #tpu.dot_dimension_numbers<[1], [0], [0], [1], [0, 0, 1, 1], [], []>} : vector<32x128xbf16>, vector<128x128xbf16>, vector<32x128xf32> -> vector<32x128xf32>
    %cst_6 = arith.constant 9.99999974E-6 : f32
    %8 = vector.broadcast %cst_6 : f32 to vector<32x128xf32>
    %9 = arith.addf %7, %8 : vector<32x128xf32>
    %10 = math.rsqrt %9 : vector<32x128xf32>
    %11 = arith.mulf %3, %10 : vector<32x128xf32>
    %c0_7 = arith.constant 0 : index
    %c0_8 = arith.constant 0 : index
    %12 = vector.load %arg4[%c0_7, %c0_8] : memref<1x128xf32, #tpu.memory_space<vmem>>, vector<1x128xf32>
    %13 = vector.broadcast %12 : vector<1x128xf32> to vector<32x128xf32>
    %14 = arith.mulf %11, %13 : vector<32x128xf32>
    %c0_9 = arith.constant 0 : index
    %c0_10 = arith.constant 0 : index
    %15 = vector.load %arg5[%c0_9, %c0_10] : memref<1x128xf32, #tpu.memory_space<vmem>>, vector<1x128xf32>
    %16 = vector.broadcast %15 : vector<1x128xf32> to vector<32x128xf32>
    %17 = arith.addf %14, %16 : vector<32x128xf32>
    %cst_11 = arith.constant 0.000000e+00 : f32
    %18 = vector.broadcast %cst_11 : f32 to vector<32x128xf32>
    %19 = arith.maximumf %17, %18 : vector<32x128xf32>
    %20 = arith.truncf %19 : vector<32x128xf32> to vector<32x128xbf16>
    %c0_12 = arith.constant 0 : index
    %c0_13 = arith.constant 0 : index
    %21 = vector.load %arg6[%c0_12, %c0_13] : memref<128x128xbf16, #tpu.memory_space<vmem>>, vector<128x128xbf16>
    %cst_14 = arith.constant dense<0.000000e+00> : vector<32x128xf32>
    %22 = tpu.matmul %20, %21, %cst_14 {dimension_numbers = #tpu.dot_dimension_numbers<[1], [0], [0], [1], [0, 0, 1, 1], [], []>} : vector<32x128xbf16>, vector<128x128xbf16>, vector<32x128xf32> -> vector<32x128xf32>
    %cst_15 = arith.constant 0.000000e+00 : f32
    %23 = vector.broadcast %cst_15 : f32 to vector<32x128xf32>
    %24 = arith.maximumf %22, %23 : vector<32x128xf32>
    %25 = arith.truncf %24 : vector<32x128xf32> to vector<32x128xbf16>
    %c0_16 = arith.constant 0 : index
    %c0_17 = arith.constant 0 : index
    %26 = vector.load %arg7[%c0_16, %c0_17] : memref<128x128xbf16, #tpu.memory_space<vmem>>, vector<128x128xbf16>
    %cst_18 = arith.constant dense<0.000000e+00> : vector<32x128xf32>
    %27 = tpu.matmul %25, %26, %cst_18 {dimension_numbers = #tpu.dot_dimension_numbers<[1], [0], [0], [1], [0, 0, 1, 1], [], []>} : vector<32x128xbf16>, vector<128x128xbf16>, vector<32x128xf32> -> vector<32x128xf32>
    %cst_19 = arith.constant 0.000000e+00 : f32
    %28 = vector.broadcast %cst_19 : f32 to vector<32x128xf32>
    %29 = arith.maximumf %27, %28 : vector<32x128xf32>
    %30 = arith.addf %24, %29 : vector<32x128xf32>
    %c0_20 = arith.constant 0 : index
    %c0_21 = arith.constant 0 : index
    %31 = vector.load %arg8[%c0_20, %c0_21] : memref<32x128xf32, #tpu.memory_space<vmem>>, vector<32x128xf32>
    tpu.vector_store %arg8[%c0_20, %c0_21], %30 {strides = array<i32>} : memref<32x128xf32, #tpu.memory_space<vmem>>, vector<32x128xf32>,
    return
  }
  func.func @transform_0(%arg0: i32) -> (i32, i32) {
    %c0_i32 = arith.constant 0 : i32
    %c0_i32_0 = arith.constant 0 : i32
    return %arg0, %c0_i32 : i32, i32
  }
  func.func @transform_1(%arg0: i32) -> (i32, i32) {
    %c0_i32 = arith.constant 0 : i32
    %c0_i32_0 = arith.constant 0 : i32
    %c0_i32_1 = arith.constant 0 : i32
    return %c0_i32, %c0_i32_0 : i32, i32
  }
  func.func @transform_2(%arg0: i32) -> (i32, i32) {
    %c0_i32 = arith.constant 0 : i32
    %c0_i32_0 = arith.constant 0 : i32
    %c0_i32_1 = arith.constant 0 : i32
    return %c0_i32, %c0_i32_0 : i32, i32
  }
  func.func @transform_3(%arg0: i32) -> (i32, i32) {
    %c0_i32 = arith.constant 0 : i32
    %c0_i32_0 = arith.constant 0 : i32
    %c0_i32_1 = arith.constant 0 : i32
    return %c0_i32, %c0_i32_0 : i32, i32
  }
  func.func @transform_4(%arg0: i32) -> (i32, i32) {
    %c0_i32 = arith.constant 0 : i32
    %c0_i32_0 = arith.constant 0 : i32
    %c0_i32_1 = arith.constant 0 : i32
    return %c0_i32, %c0_i32_0 : i32, i32
  }
  func.func @transform_5(%arg0: i32) -> (i32, i32) {
    %c0_i32 = arith.constant 0 : i32
    %c0_i32_0 = arith.constant 0 : i32
    %c0_i32_1 = arith.constant 0 : i32
    return %c0_i32, %c0_i32_0 : i32, i32
  }
  func.func @transform_6(%arg0: i32) -> (i32, i32) {
    %c0_i32 = arith.constant 0 : i32
    %c0_i32_0 = arith.constant 0 : i32
    %c0_i32_1 = arith.constant 0 : i32
    return %c0_i32, %c0_i32_0 : i32, i32
  }
  func.func @transform_7(%arg0: i32) -> (i32, i32) {
    %c0_i32 = arith.constant 0 : i32
    %c0_i32_0 = arith.constant 0 : i32
    return %arg0, %c0_i32 : i32, i32
  }
}

</mosaic_0001>

<llo_original>
// kernel: mlp_forward.1
$region0: #{mlp_forward.1}
  #allocation0 [shape = 'u32[]', space=smem, size = 0x4, offset = 0x4, fixed_abs, tag = 'smem constant byte address 0x4 - core index']
  #allocation1 [shape = 'u32[144,128]{1,0:T(1,128)}', space=vmem, size = 0x12000, scoped, tag = 'internal scratch']
  %s0 = inlined_call_operand.vmem [shape: f32[64,128], index: 0, kind: input, shape index: {}]
  %s1 = inlined_call_operand.vmem [shape: bf16[128,128], index: 1, kind: input, shape index: {}]
  %s2 = inlined_call_operand.vmem [shape: bf16[128,128], index: 2, kind: input, shape index: {}]
  %s3 = inlined_call_operand.vmem [shape: f32[1,128], index: 3, kind: input, shape index: {}]
  %s4 = inlined_call_operand.vmem [shape: f32[1,128], index: 4, kind: input, shape index: {}]
  %s5 = inlined_call_operand.vmem [shape: bf16[128,128], index: 5, kind: input, shape index: {}]
  %s6 = inlined_call_operand.vmem [shape: bf16[128,128], index: 6, kind: input, shape index: {}]
  %s7 = inlined_call_operand.vmem [shape: f32[64,128], index: 7, kind: output, shape index: {}]
  %s8 = sld [smem:[#allocation0]]
  $region61: #{mlp_forward.1} parent=0
    _
  %s10 = ssub.s32 1, %s8
  %s11 = scalar_select 0, %s10, %s8
  loop: start=0, step=1, limit=4
  $region2: #{mlp_forward.1} parent=0 // loop_pre_header
    _
  $region3: #{mlp_forward.1} parent=0 // loop_header
    %s13 = sphi 0, %s17
    %p14 = scmp.ge.s32.totalorder %s13, 4
    %s23 = sphi 0, %s25
    %s26 = sphi 0, %s23
    %s27 = sphi 0, %s26
    %s43 = sphi 0, %s27
    %s47 = sphi 0, %s47
    %s49 = sphi 0, %s47
    %s50 = sphi 0, %s49
    %s64 = sphi 0, %s50
    %s68 = sphi 0, %s68
    %s70 = sphi 0, %s68
    %s71 = sphi 0, %s70
    %s85 = sphi 0, %s71
    %s89 = sphi 0, %s89
    %s91 = sphi 0, %s89
    %s92 = sphi 0, %s91
    %s106 = sphi 0, %s92
    %s110 = sphi 0, %s110
    %s112 = sphi 0, %s110
    %s113 = sphi 0, %s112
    %s127 = sphi 0, %s113
    %s131 = sphi 0, %s131
    %s133 = sphi 0, %s131
    %s134 = sphi 0, %s133
    %s148 = sphi 0, %s134
    %s152 = sphi 0, %s152
    %s154 = sphi 0, %s152
    %s155 = sphi 0, %s154
    %s169 = sphi 0, %s155
    %s175 = sphi 0, %s177
    %s178 = sphi 0, %s175
    %s179 = sphi 0, %s178
    %s195 = sphi 0, %s179
  $region4: #{mlp_forward.1} parent=0 // loop_header_branch
    %16 = sbr.rel (%p14) target = $region8
  $region5: #{mlp_forward.1} parent=0 // loop_body
    %s18 = ssub.s32 %s13, 1
    %s19 = ssub.s32 %s13, 2
    %s20 = sadd.s32 %s13, 1
    %s21 = ssub.s32 %s13, %s20
    %p22 = scmp.eq.s32.totalorder %s21, 0
    %s24 = sadd.s32 %s23, 1
    %s25 = scalar_select %p22, %s23, %s24
    %p28 = pneg %p22
    %p29 = scmp.eq.s32.totalorder %s13, 1
    %p30 = por %p28, %p29
    %p31 = scmp.ne.s32.totalorder %s23, %s26
    %p32 = scmp.eq.s32.totalorder %s13, 0
    %p33 = por %p31, %p32
    %p34 = scmp.ne.s32.totalorder %s23, %s26
    %p35 = scmp.eq.s32.totalorder %s18, 1
    %p36 = por %p34, %p35
    %p37 = scmp.ne.s32.totalorder %s26, %s27
    %p38 = scmp.eq.s32.totalorder %s18, 0
    %p39 = por %p37, %p38
    %p40 = scmp.ne.s32.totalorder %s26, %s27
    %p41 = scmp.eq.s32.totalorder %s19, 1
    %p42 = por %p40, %p41
    %p44 = scmp.ne.s32.totalorder %s27, %s43
    %p45 = scmp.eq.s32.totalorder %s19, 0
    %p46 = por %p44, %p45
    %s48 = sadd.s32 %s47, 1
    %p51 = scmp.eq.s32.totalorder %s13, 1
    %p52 = scmp.ne.s32.totalorder %s47, %s49
    %p53 = scmp.eq.s32.totalorder %s13, 0
    %p54 = por %p52, %p53
    %p55 = scmp.ne.s32.totalorder %s47, %s49
    %p56 = scmp.eq.s32.totalorder %s18, 1
    %p57 = por %p55, %p56
    %p58 = scmp.ne.s32.totalorder %s49, %s50
    %p59 = scmp.eq.s32.totalorder %s18, 0
    %p60 = por %p58, %p59
    %p61 = scmp.ne.s32.totalorder %s49, %s50
    %p62 = scmp.eq.s32.totalorder %s19, 1
    %p63 = por %p61, %p62
    %p65 = scmp.ne.s32.totalorder %s50, %s64
    %p66 = scmp.eq.s32.totalorder %s19, 0
    %p67 = por %p65, %p66
    %s69 = sadd.s32 %s68, 1
    %p72 = scmp.eq.s32.totalorder %s13, 1
    %p73 = scmp.ne.s32.totalorder %s68, %s70
    %p74 = scmp.eq.s32.totalorder %s13, 0
    %p75 = por %p73, %p74
    %p76 = scmp.ne.s32.totalorder %s68, %s70
    %p77 = scmp.eq.s32.totalorder %s18, 1
    %p78 = por %p76, %p77
    %p79 = scmp.ne.s32.totalorder %s70, %s71
    %p80 = scmp.eq.s32.totalorder %s18, 0
    %p81 = por %p79, %p80
    %p82 = scmp.ne.s32.totalorder %s70, %s71
    %p83 = scmp.eq.s32.totalorder %s19, 1
    %p84 = por %p82, %p83
    %p86 = scmp.ne.s32.totalorder %s71, %s85
    %p87 = scmp.eq.s32.totalorder %s19, 0
    %p88 = por %p86, %p87
    %s90 = sadd.s32 %s89, 1
    %p93 = scmp.eq.s32.totalorder %s13, 1
    %p94 = scmp.ne.s32.totalorder %s89, %s91
    %p95 = scmp.eq.s32.totalorder %s13, 0
    %p96 = por %p94, %p95
    %p97 = scmp.ne.s32.totalorder %s89, %s91
    %p98 = scmp.eq.s32.totalorder %s18, 1
    %p99 = por %p97, %p98
    %p100 = scmp.ne.s32.totalorder %s91, %s92
    %p101 = scmp.eq.s32.totalorder %s18, 0
    %p102 = por %p100, %p101
    %p103 = scmp.ne.s32.totalorder %s91, %s92
    %p104 = scmp.eq.s32.totalorder %s19, 1
    %p105 = por %p103, %p104
    %p107 = scmp.ne.s32.totalorder %s92, %s106
    %p108 = scmp.eq.s32.totalorder %s19, 0
    %p109 = por %p107, %p108
    %s111 = sadd.s32 %s110, 1
    %p114 = scmp.eq.s32.totalorder %s13, 1
    %p115 = scmp.ne.s32.totalorder %s110, %s112
    %p116 = scmp.eq.s32.totalorder %s13, 0
    %p117 = por %p115, %p116
    %p118 = scmp.ne.s32.totalorder %s110, %s112
    %p119 = scmp.eq.s32.totalorder %s18, 1
    %p120 = por %p118, %p119
    %p121 = scmp.ne.s32.totalorder %s112, %s113
    %p122 = scmp.eq.s32.totalorder %s18, 0
    %p123 = por %p121, %p122
    %p124 = scmp.ne.s32.totalorder %s112, %s113
    %p125 = scmp.eq.s32.totalorder %s19, 1
    %p126 = por %p124, %p125
    %p128 = scmp.ne.s32.totalorder %s113, %s127
    %p129 = scmp.eq.s32.totalorder %s19, 0
    %p130 = por %p128, %p129
    %s132 = sadd.s32 %s131, 1
    %p135 = scmp.eq.s32.totalorder %s13, 1
    %p136 = scmp.ne.s32.totalorder %s131, %s133
    %p137 = scmp.eq.s32.totalorder %s13, 0
    %p138 = por %p136, %p137
    %p139 = scmp.ne.s32.totalorder %s131, %s133
    %p140 = scmp.eq.s32.totalorder %s18, 1
    %p141 = por %p139, %p140
    %p142 = scmp.ne.s32.totalorder %s133, %s134
    %p143 = scmp.eq.s32.totalorder %s18, 0
    %p144 = por %p142, %p143
    %p145 = scmp.ne.s32.totalorder %s133, %s134
    %p146 = scmp.eq.s32.totalorder %s19, 1
    %p147 = por %p145, %p146
    %p149 = scmp.ne.s32.totalorder %s134, %s148
    %p150 = scmp.eq.s32.totalorder %s19, 0
    %p151 = por %p149, %p150
    %s153 = sadd.s32 %s152, 1
    %p156 = scmp.eq.s32.totalorder %s13, 1
    %p157 = scmp.ne.s32.totalorder %s152, %s154
    %p158 = scmp.eq.s32.totalorder %s13, 0
    %p159 = por %p157, %p158
    %p160 = scmp.ne.s32.totalorder %s152, %s154
    %p161 = scmp.eq.s32.totalorder %s18, 1
    %p162 = por %p160, %p161
    %p163 = scmp.ne.s32.totalorder %s154, %s155
    %p164 = scmp.eq.s32.totalorder %s18, 0
    %p165 = por %p163, %p164
    %p166 = scmp.ne.s32.totalorder %s154, %s155
    %p167 = scmp.eq.s32.totalorder %s19, 1
    %p168 = por %p166, %p167
    %p170 = scmp.ne.s32.totalorder %s155, %s169
    %p171 = scmp.eq.s32.totalorder %s19, 0
    %p172 = por %p170, %p171
    %s173 = ssub.s32 %s13, %s20
    %p174 = scmp.eq.s32.totalorder %s173, 0
    %s176 = sadd.s32 %s175, 1
    %s177 = scalar_select %p174, %s175, %s176
    %p180 = pneg %p174
    %p181 = scmp.eq.s32.totalorder %s13, 1
    %p182 = por %p180, %p181
    %p183 = scmp.ne.s32.totalorder %s175, %s178
    %p184 = scmp.eq.s32.totalorder %s13, 0
    %p185 = por %p183, %p184
    %p186 = scmp.ne.s32.totalorder %s175, %s178
    %p187 = scmp.eq.s32.totalorder %s18, 1
    %p188 = por %p186, %p187
    %p189 = scmp.ne.s32.totalorder %s178, %s179
    %p190 = scmp.eq.s32.totalorder %s18, 0
    %p191 = por %p189, %p190
    %p192 = scmp.ne.s32.totalorder %s178, %s179
    %p193 = scmp.eq.s32.totalorder %s19, 1
    %p194 = por %p192, %p193
    %p196 = scmp.ne.s32.totalorder %s179, %s195
    %p197 = scmp.eq.s32.totalorder %s19, 0
    %p198 = por %p196, %p197
    %p199 = scmp.le.s32.totalorder 1, %s13
    %p200 = scmp.lt.s32.totalorder %s13, 3
    %p201 = pnand %p199, %p200
    %p202 = pneg %p201
    // Predicated region
    $region9: #{mlp_forward.1} parent=5 // pred_check
      _
    $region10: #{mlp_forward.1} parent=5 // pred_check_branch
      %204 = sbr.rel (%p201) target = $region12
    $region11: #{mlp_forward.1} parent=5 // pred_region
      %s205 = ssub.s32 %s13, 1
      // Predicated region
      $region13: #{mlp_forward.1} parent=11 // pred_check
        %p206 = pneg %p60
      $region14: #{mlp_forward.1} parent=11 // pred_check_branch
        %208 = sbr.rel (%p206) target = $region16
      $region15: #{mlp_forward.1} parent=11 // pred_region
        _
      $region16: #{mlp_forward.1} parent=11 // pred_fallthru
        _
      // Predicated region
      $region17: #{mlp_forward.1} parent=11 // pred_check
        %p209 = pneg %p81
      $region18: #{mlp_forward.1} parent=11 // pred_check_branch
        %211 = sbr.rel (%p209) target = $region20
      $region19: #{mlp_forward.1} parent=11 // pred_region
        _
      $region20: #{mlp_forward.1} parent=11 // pred_fallthru
        _
      // Predicated region
      $region21: #{mlp_forward.1} parent=11 // pred_check
        %p212 = pneg %p102
      $region22: #{mlp_forward.1} parent=11 // pred_check_branch
        %214 = sbr.rel (%p212) target = $region24
      $region23: #{mlp_forward.1} parent=11 // pred_region
        _
      $region24: #{mlp_forward.1} parent=11 // pred_fallthru
        _
      // Predicated region
      $region25: #{mlp_forward.1} parent=11 // pred_check
        %p215 = pneg %p123
      $region26: #{mlp_forward.1} parent=11 // pred_check_branch
        %217 = sbr.rel (%p215) target = $region28
      $region27: #{mlp_forward.1} parent=11 // pred_region
        _
      $region28: #{mlp_forward.1} parent=11 // pred_fallthru
        _
      // Predicated region
      $region29: #{mlp_forward.1} parent=11 // pred_check
        %p218 = pneg %p144
      $region30: #{mlp_forward.1} parent=11 // pred_check_branch
        %220 = sbr.rel (%p218) target = $region32
      $region31: #{mlp_forward.1} parent=11 // pred_region
        _
      $region32: #{mlp_forward.1} parent=11 // pred_fallthru
        _
      // Predicated region
      $region33: #{mlp_forward.1} parent=11 // pred_check
        %p221 = pneg %p165
      $region34: #{mlp_forward.1} parent=11 // pred_check_branch
        %223 = sbr.rel (%p221) target = $region36
      $region35: #{mlp_forward.1} parent=11 // pred_region
        _
      $region36: #{mlp_forward.1} parent=11 // pred_fallthru
        _
    $region12: #{mlp_forward.1} parent=5 // pred_fallthru
      _
    %p224 = scmp.lt.s32.totalorder %s13, 2
    // Predicated region
    $region37: #{mlp_forward.1} parent=5 // pred_check
      %p225 = pneg %p224
    $region38: #{mlp_forward.1} parent=5 // pred_check_branch
      %227 = sbr.rel (%p225) target = $region40
    $region39: #{mlp_forward.1} parent=5 // pred_region
      // Predicated region
      $region41: #{mlp_forward.1} parent=39 // pred_check
        %p228 = pneg %p33
      $region42: #{mlp_forward.1} parent=39 // pred_check_branch
        %230 = sbr.rel (%p228) target = $region44
      $region43: #{mlp_forward.1} parent=39 // pred_region
        %s231 = smul.u32 4, %s13
        %p232 = scmp.lt.s32.totalorder %s231, 7
        %s233 = scalar_select %p232, %s231, 7
        %s234 = smul.addr %s233, 8
        %s235 = scalar_lea.vmem %s0, %s234
        %s236 = smul.u32 4, %s13
      $region44: #{mlp_forward.1} parent=39 // pred_fallthru
        _
    $region40: #{mlp_forward.1} parent=5 // pred_fallthru
      _
    %p237 = scmp.le.s32.totalorder 1, %s13
    %p238 = scmp.lt.s32.totalorder %s13, 3
    %p239 = pnand %p237, %p238
    %p240 = pneg %p239
    // Predicated region
    $region45: #{mlp_forward.1} parent=5 // pred_check
      _
    $region46: #{mlp_forward.1} parent=5 // pred_check_branch
      %242 = sbr.rel (%p239) target = $region48
    $region47: #{mlp_forward.1} parent=5 // pred_region
      %s243 = ssub.s32 %s13, 1
      %s244 = smul.u32 4, %s18
      %p245 = scmp.lt.s32.totalorder %s244, 7
      %s246 = scalar_select %p245, %s244, 7
      %s247 = smul.addr %s246, 8
      %s248 = scalar_lea.vmem %s0, %s247
      %p249 = pneg %p39
      %p250 = pneg %p36
      %p251 = pneg %p60
      %p252 = pneg %p57
      %p253 = pneg %p81
      %p254 = pneg %p78
      %p255 = pneg %p102
      %p256 = pneg %p99
      %p257 = pneg %p123
      %p258 = pneg %p120
      %p259 = pneg %p144
      %p260 = pneg %p141
      %p261 = pneg %p165
      %p262 = pneg %p162
      %p263 = pneg %p191
      %p264 = pneg %p188
      %s265 = smul.u32 4, %s18
      %p266 = scmp.lt.s32.totalorder %s265, 7
      %s267 = scalar_select %p266, %s265, 7
      %s268 = smul.addr %s267, 8
      %s269 = scalar_lea.vmem %s7, %s268
      %s270 = smul.u32 4, %s18
      %p271 = scmp.lt.s32.totalorder %s270, 7
      %s272 = scalar_select %p271, %s270, 7
      %s273 = smul.addr %s272, 8
      %s274 = scalar_lea.vmem %s0, %s273
      %s275 = smul.u32 4, %s18
      %s276 = smul.u32 4, %s18
      %p277 = scmp.lt.s32.totalorder %s276, 7
      %s278 = scalar_select %p277, %s276, 7
      %s279 = smul.addr %s278, 8
      %s280 = scalar_lea.vmem %s7, %s279
      %s281 = smul.u32 4, %s18
      %v283 = vld [vmem:[%s274] sm:$0xff]
      %v284 = vld [vmem:[%s274 + $0x8] sm:$0xff]
      %v285 = vld [vmem:[%s274 + $0x10] sm:$0xff]
      %v286 = vld [vmem:[%s274 + $0x18] sm:$0xff]
      %v287 = vpack.c.bf16 %v284, %v283
      %v288 = vpack.c.bf16 %v286, %v285
      %v289 = vld [vmem:[%s1] sm:$0xf]
      %v290 = vld [vmem:[%s1 + $0x4] sm:$0xf]
      %v291 = vld [vmem:[%s1 + $0x8] sm:$0xf]
      %v292 = vld [vmem:[%s1 + $0xc] sm:$0xf]
      %v293 = vld [vmem:[%s1 + $0x10] sm:$0xf]
      %v294 = vld [vmem:[%s1 + $0x14] sm:$0xf]
      %v295 = vld [vmem:[%s1 + $0x18] sm:$0xf]
      %v296 = vld [vmem:[%s1 + $0x1c] sm:$0xf]
      %v297 = vld [vmem:[%s1 + $0x20] sm:$0xf]
      %v298 = vld [vmem:[%s1 + $0x24] sm:$0xf]
      %v299 = vld [vmem:[%s1 + $0x28] sm:$0xf]
      %v300 = vld [vmem:[%s1 + $0x2c] sm:$0xf]
      %v301 = vld [vmem:[%s1 + $0x30] sm:$0xf]
      %v302 = vld [vmem:[%s1 + $0x34] sm:$0xf]
      %v303 = vld [vmem:[%s1 + $0x38] sm:$0xf]
      %v304 = vld [vmem:[%s1 + $0x3c] sm:$0xf]
      %v321 = vunpack.c.l.b16 %v289
      %v322 = vunpack.c.l.b16 %v290
      %v323 = vunpack.c.l.b16 %v291
      %v324 = vunpack.c.l.b16 %v292
      %v325 = vunpack.c.l.b16 %v293
      %v326 = vunpack.c.l.b16 %v294
      %v327 = vunpack.c.l.b16 %v295
      %v328 = vunpack.c.l.b16 %v296
      %v329 = vunpack.c.l.b16 %v297
      %v330 = vunpack.c.l.b16 %v298
      %v331 = vunpack.c.l.b16 %v299
      %v332 = vunpack.c.l.b16 %v300
      %v333 = vunpack.c.l.b16 %v301
      %v334 = vunpack.c.l.b16 %v302
      %v335 = vunpack.c.l.b16 %v303
      %v336 = vunpack.c.l.b16 %v304
      %v337 = vpack.c.b16 %v322, %v321
      %v338 = vpack.c.b16 %v324, %v323
      %v339 = vpack.c.b16 %v326, %v325
      %v340 = vpack.c.b16 %v328, %v327
      %v341 = vpack.c.b16 %v330, %v329
      %v342 = vpack.c.b16 %v332, %v331
      %v343 = vpack.c.b16 %v334, %v333
      %v344 = vpack.c.b16 %v336, %v335
      %353 = vmatprep.subr.bf16.mxu0 0
      %354 = vmatpush1.bf16.msra.mxu0 %v344
      %355 = vmatprep.subr.bf16.mxu0 0
      %356 = vmatpush1.bf16.msra.mxu0 %v343
      %357 = vmatprep.subr.bf16.mxu0 0
      %358 = vmatpush1.bf16.msra.mxu0 %v342
      %359 = vmatprep.subr.bf16.mxu0 0
      %360 = vmatpush1.bf16.msra.mxu0 %v341
      %361 = vmatprep.subr.bf16.mxu0 0
      %362 = vmatpush1.bf16.msra.mxu0 %v340
      %363 = vmatprep.subr.bf16.mxu0 0
      %364 = vmatpush1.bf16.msra.mxu0 %v339
      %365 = vmatprep.subr.bf16.mxu0 0
      %366 = vmatpush1.bf16.msra.mxu0 %v338
      %367 = vmatprep.subr.bf16.mxu0 0
      %368 = vmatpush1.bf16.msra.mxu0 %v337
      %369 = vmatprep.subr.bf16.mxu0 0
      %370 = vmatpush2.bf16.msra.mxu0 0
      %371 = vmatprep.subr.bf16.mxu0 0
      %372 = vmatpush2.bf16.msra.mxu0 0
      %373 = vmatprep.subr.bf16.mxu0 0
      %374 = vmatpush2.bf16.msra.mxu0 0
      %375 = vmatprep.subr.bf16.mxu0 0
      %376 = vmatpush2.bf16.msra.mxu0 0
      %377 = vmatprep.subr.bf16.mxu0 0
      %378 = vmatpush2.bf16.msra.mxu0 0
      %379 = vmatprep.subr.bf16.mxu0 0
      %380 = vmatpush2.bf16.msra.mxu0 0
      %381 = vmatprep.subr.bf16.mxu0 0
      %382 = vmatpush2.bf16.msra.mxu0 0
      %383 = vmatprep.subr.bf16.mxu0 0
      %384 = vmatpush2.bf16.msra.mxu0 0
      %385 = vmatprep.mubr.bf16.mxu0 0
      %386 = vmatmul.mubr.bf16.gmra.mxu0 %v287
      %v387 = vpop.f32.mrf.mxu0
      %v388 = vadd.f32 0.0, %v387
      %v389 = vpop.f32.mrf.mxu0
      %v390 = vpop.f32.mrf.mxu0
      %v391 = vadd.f32 0.0, %v390
      %v392 = vpop.f32.mrf.mxu0
      %393 = vmatprep.mubr.bf16.mxu0 0
      %394 = vmatmul.mubr.bf16.gmra.mxu0 %v288
      %v395 = vpop.f32.mrf.mxu0
      %v396 = vadd.f32 0.0, %v395
      %v397 = vpop.f32.mrf.mxu0
      %v398 = vpop.f32.mrf.mxu0
      %v399 = vadd.f32 0.0, %v398
      %v400 = vpop.f32.mrf.mxu0
      %401 = vdwg.mxu0
      %v402 = vmul.f32 %v388, %v388
      %v403 = vmul.f32 %v391, %v391
      %v404 = vmul.f32 %v396, %v396
      %v405 = vmul.f32 %v399, %v399
      %v406 = vpack.c.bf16 %v403, %v402
      %v407 = vpack.c.bf16 %v405, %v404
      %v408 = vld [vmem:[%s2] sm:$0xf]
      %v409 = vld [vmem:[%s2 + $0x4] sm:$0xf]
      %v410 = vld [vmem:[%s2 + $0x8] sm:$0xf]
      %v411 = vld [vmem:[%s2 + $0xc] sm:$0xf]
      %v412 = vld [vmem:[%s2 + $0x10] sm:$0xf]
      %v413 = vld [vmem:[%s2 + $0x14] sm:$0xf]
      %v414 = vld [vmem:[%s2 + $0x18] sm:$0xf]
      %v415 = vld [vmem:[%s2 + $0x1c] sm:$0xf]
      %v416 = vld [vmem:[%s2 + $0x20] sm:$0xf]
      %v417 = vld [vmem:[%s2 + $0x24] sm:$0xf]
      %v418 = vld [vmem:[%s2 + $0x28] sm:$0xf]
      %v419 = vld [vmem:[%s2 + $0x2c] sm:$0xf]
      %v420 = vld [vmem:[%s2 + $0x30] sm:$0xf]
      %v421 = vld [vmem:[%s2 + $0x34] sm:$0xf]
      %v422 = vld [vmem:[%s2 + $0x38] sm:$0xf]
      %v423 = vld [vmem:[%s2 + $0x3c] sm:$0xf]
      %v440 = vunpack.c.l.b16 %v408
      %v441 = vunpack.c.l.b16 %v409
      %v442 = vunpack.c.l.b16 %v410
      %v443 = vunpack.c.l.b16 %v411
      %v444 = vunpack.c.l.b16 %v412
      %v445 = vunpack.c.l.b16 %v413
      %v446 = vunpack.c.l.b16 %v414
      %v447 = vunpack.c.l.b16 %v415
      %v448 = vunpack.c.l.b16 %v416
      %v449 = vunpack.c.l.b16 %v417
      %v450 = vunpack.c.l.b16 %v418
      %v451 = vunpack.c.l.b16 %v419
      %v452 = vunpack.c.l.b16 %v420
      %v453 = vunpack.c.l.b16 %v421
      %v454 = vunpack.c.l.b16 %v422
      %v455 = vunpack.c.l.b16 %v423
      %v456 = vpack.c.b16 %v441, %v440
      %v457 = vpack.c.b16 %v443, %v442
      %v458 = vpack.c.b16 %v445, %v444
      %v459 = vpack.c.b16 %v447, %v446
      %v460 = vpack.c.b16 %v449, %v448
      %v461 = vpack.c.b16 %v451, %v450
      %v462 = vpack.c.b16 %v453, %v452
      %v463 = vpack.c.b16 %v455, %v454
      %472 = vmatprep.subr.bf16.mxu0 0
      %473 = vmatpush1.bf16.msra.mxu0 %v463
      %474 = vmatprep.subr.bf16.mxu0 0
      %475 = vmatpush1.bf16.msra.mxu0 %v462
      %476 = vmatprep.subr.bf16.mxu0 0
      %477 = vmatpush1.bf16.msra.mxu0 %v461
      %478 = vmatprep.subr.bf16.mxu0 0
      %479 = vmatpush1.bf16.msra.mxu0 %v460
      %480 = vmatprep.subr.bf16.mxu0 0
      %481 = vmatpush1.bf16.msra.mxu0 %v459
      %482 = vmatprep.subr.bf16.mxu0 0
      %483 = vmatpush1.bf16.msra.mxu0 %v458
      %484 = vmatprep.subr.bf16.mxu0 0
      %485 = vmatpush1.bf16.msra.mxu0 %v457
      %486 = vmatprep.subr.bf16.mxu0 0
      %487 = vmatpush1.bf16.msra.mxu0 %v456
      %488 = vmatprep.subr.bf16.mxu0 0
      %489 = vmatpush2.bf16.msra.mxu0 0
      %490 = vmatprep.subr.bf16.mxu0 0
      %491 = vmatpush2.bf16.msra.mxu0 0
      %492 = vmatprep.subr.bf16.mxu0 0
      %493 = vmatpush2.bf16.msra.mxu0 0
      %494 = vmatprep.subr.bf16.mxu0 0
      %495 = vmatpush2.bf16.msra.mxu0 0
      %496 = vmatprep.subr.bf16.mxu0 0
      %497 = vmatpush2.bf16.msra.mxu0 0
      %498 = vmatprep.subr.bf16.mxu0 0
      %499 = vmatpush2.bf16.msra.mxu0 0
      %500 = vmatprep.subr.bf16.mxu0 0
      %501 = vmatpush2.bf16.msra.mxu0 0
      %502 = vmatprep.subr.bf16.mxu0 0
      %503 = vmatpush2.bf16.msra.mxu0 0
      %504 = vmatprep.mubr.bf16.mxu0 0
      %505 = vmatmul.mubr.bf16.gmra.mxu0 %v406
      %v506 = vpop.f32.mrf.mxu0
      %v507 = vadd.f32 1e-05, %v506
      %v508 = vpop.f32.mrf.mxu0
      %v509 = vpop.f32.mrf.mxu0
      %v510 = vadd.f32 1e-05, %v509
      %v511 = vpop.f32.mrf.mxu0
      %512 = vmatprep.mubr.bf16.mxu0 0
      %513 = vmatmul.mubr.bf16.gmra.mxu0 %v407
      %v514 = vpop.f32.mrf.mxu0
      %v515 = vadd.f32 1e-05, %v514
      %v516 = vpop.f32.mrf.mxu0
      %v517 = vpop.f32.mrf.mxu0
      %v518 = vadd.f32 1e-05, %v517
      %v519 = vpop.f32.mrf.mxu0
      %520 = vdwg.mxu0
      %v521 = vrsqrt.pop %v507
      %v522 = vrsqrt.pop %v510
      %v523 = vrsqrt.pop %v515
      %v524 = vrsqrt.pop %v518
      %v525 = vmul.f32 %v388, %v521
      %v526 = vmul.f32 %v391, %v522
      %v527 = vmul.f32 %v396, %v523
      %v528 = vmul.f32 %v399, %v524
      %v529 = vld [vmem:[%s3] sm:$0x1]
      %v531 = vlaneseq
      %v532 = vshrl.u32 %v531, 7
      %v533 = vsub.s32 0, %v532
      %v534 = vrot.slane %v529, %v533
      %v536 = vmul.f32 %v525, %v534
      %v537 = vmul.f32 %v526, %v534
      %v538 = vmul.f32 %v527, %v534
      %v539 = vmul.f32 %v528, %v534
      %v540 = vld [vmem:[%s4] sm:$0x1]
      %v542 = vlaneseq
      %v543 = vshrl.u32 %v542, 7
      %v544 = vsub.s32 0, %v543
      %v545 = vrot.slane %v540, %v544
      %v547 = vadd.f32 %v536, %v545
      %v548 = vadd.f32 %v537, %v545
      %v549 = vadd.f32 %v538, %v545
      %v550 = vadd.f32 %v539, %v545
      %v551 = vmax.f32 %v547, 0.0
      %v552 = vmax.f32 %v548, 0.0
      %v553 = vmax.f32 %v549, 0.0
      %v554 = vmax.f32 %v550, 0.0
      %v555 = vpack.c.bf16 %v552, %v551
      %v556 = vpack.c.bf16 %v554, %v553
      %v557 = vld [vmem:[%s5] sm:$0xf]
      %v558 = vld [vmem:[%s5 + $0x4] sm:$0xf]
      %v559 = vld [vmem:[%s5 + $0x8] sm:$0xf]
      %v560 = vld [vmem:[%s5 + $0xc] sm:$0xf]
      %v561 = vld [vmem:[%s5 + $0x10] sm:$0xf]
      %v562 = vld [vmem:[%s5 + $0x14] sm:$0xf]
      %v563 = vld [vmem:[%s5 + $0x18] sm:$0xf]
      %v564 = vld [vmem:[%s5 + $0x1c] sm:$0xf]
      %v565 = vld [vmem:[%s5 + $0x20] sm:$0xf]
      %v566 = vld [vmem:[%s5 + $0x24] sm:$0xf]
      %v567 = vld [vmem:[%s5 + $0x28] sm:$0xf]
      %v568 = vld [vmem:[%s5 + $0x2c] sm:$0xf]
      %v569 = vld [vmem:[%s5 + $0x30] sm:$0xf]
      %v570 = vld [vmem:[%s5 + $0x34] sm:$0xf]
      %v571 = vld [vmem:[%s5 + $0x38] sm:$0xf]
      %v572 = vld [vmem:[%s5 + $0x3c] sm:$0xf]
      %v589 = vunpack.c.l.b16 %v557
      %v590 = vunpack.c.l.b16 %v558
      %v591 = vunpack.c.l.b16 %v559
      %v592 = vunpack.c.l.b16 %v560
      %v593 = vunpack.c.l.b16 %v561
      %v594 = vunpack.c.l.b16 %v562
      %v595 = vunpack.c.l.b16 %v563
      %v596 = vunpack.c.l.b16 %v564
      %v597 = vunpack.c.l.b16 %v565
      %v598 = vunpack.c.l.b16 %v566
      %v599 = vunpack.c.l.b16 %v567
      %v600 = vunpack.c.l.b16 %v568
      %v601 = vunpack.c.l.b16 %v569
      %v602 = vunpack.c.l.b16 %v570
      %v603 = vunpack.c.l.b16 %v571
      %v604 = vunpack.c.l.b16 %v572
      %v605 = vpack.c.b16 %v590, %v589
      %v606 = vpack.c.b16 %v592, %v591
      %v607 = vpack.c.b16 %v594, %v593
      %v608 = vpack.c.b16 %v596, %v595
      %v609 = vpack.c.b16 %v598, %v597
      %v610 = vpack.c.b16 %v600, %v599
      %v611 = vpack.c.b16 %v602, %v601
      %v612 = vpack.c.b16 %v604, %v603
      %621 = vmatprep.subr.bf16.mxu0 0
      %622 = vmatpush1.bf16.msra.mxu0 %v612
      %623 = vmatprep.subr.bf16.mxu0 0
      %624 = vmatpush1.bf16.msra.mxu0 %v611
      %625 = vmatprep.subr.bf16.mxu0 0
      %626 = vmatpush1.bf16.msra.mxu0 %v610
      %627 = vmatprep.subr.bf16.mxu0 0
      %628 = vmatpush1.bf16.msra.mxu0 %v609
      %629 = vmatprep.subr.bf16.mxu0 0
      %630 = vmatpush1.bf16.msra.mxu0 %v608
      %631 = vmatprep.subr.bf16.mxu0 0
      %632 = vmatpush1.bf16.msra.mxu0 %v607
      %633 = vmatprep.subr.bf16.mxu0 0
      %634 = vmatpush1.bf16.msra.mxu0 %v606
      %635 = vmatprep.subr.bf16.mxu0 0
      %636 = vmatpush1.bf16.msra.mxu0 %v605
      %637 = vmatprep.subr.bf16.mxu0 0
      %638 = vmatpush2.bf16.msra.mxu0 0
      %639 = vmatprep.subr.bf16.mxu0 0
      %640 = vmatpush2.bf16.msra.mxu0 0
      %641 = vmatprep.subr.bf16.mxu0 0
      %642 = vmatpush2.bf16.msra.mxu0 0
      %643 = vmatprep.subr.bf16.mxu0 0
      %644 = vmatpush2.bf16.msra.mxu0 0
      %645 = vmatprep.subr.bf16.mxu0 0
      %646 = vmatpush2.bf16.msra.mxu0 0
      %647 = vmatprep.subr.bf16.mxu0 0
      %648 = vmatpush2.bf16.msra.mxu0 0
      %649 = vmatprep.subr.bf16.mxu0 0
      %650 = vmatpush2.bf16.msra.mxu0 0
      %651 = vmatprep.subr.bf16.mxu0 0
      %652 = vmatpush2.bf16.msra.mxu0 0
      %653 = vmatprep.mubr.bf16.mxu0 0
      %654 = vmatmul.mubr.bf16.gmra.mxu0 %v555
      %v655 = vpop.f32.mrf.mxu0
      %v656 = vadd.f32 0.0, %v655
      %v657 = vpop.f32.mrf.mxu0
      %v658 = vpop.f32.mrf.mxu0
      %v659 = vadd.f32 0.0, %v658
      %v660 = vpop.f32.mrf.mxu0
      %661 = vmatprep.mubr.bf16.mxu0 0
      %662 = vmatmul.mubr.bf16.gmra.mxu0 %v556
      %v663 = vpop.f32.mrf.mxu0
      %v664 = vadd.f32 0.0, %v663
      %v665 = vpop.f32.mrf.mxu0
      %v666 = vpop.f32.mrf.mxu0
      %v667 = vadd.f32 0.0, %v666
      %v668 = vpop.f32.mrf.mxu0
      %669 = vdwg.mxu0
      %v670 = vmax.f32 %v656, 0.0
      %v671 = vmax.f32 %v659, 0.0
      %v672 = vmax.f32 %v664, 0.0
      %v673 = vmax.f32 %v667, 0.0
      %v674 = vpack.c.bf16 %v671, %v670
      %v675 = vpack.c.bf16 %v673, %v672
      %v676 = vld [vmem:[%s6] sm:$0xf]
      %v677 = vld [vmem:[%s6 + $0x4] sm:$0xf]
      %v678 = vld [vmem:[%s6 + $0x8] sm:$0xf]
      %v679 = vld [vmem:[%s6 + $0xc] sm:$0xf]
      %v680 = vld [vmem:[%s6 + $0x10] sm:$0xf]
      %v681 = vld [vmem:[%s6 + $0x14] sm:$0xf]
      %v682 = vld [vmem:[%s6 + $0x18] sm:$0xf]
      %v683 = vld [vmem:[%s6 + $0x1c] sm:$0xf]
      %v684 = vld [vmem:[%s6 + $0x20] sm:$0xf]
      %v685 = vld [vmem:[%s6 + $0x24] sm:$0xf]
      %v686 = vld [vmem:[%s6 + $0x28] sm:$0xf]
      %v687 = vld [vmem:[%s6 + $0x2c] sm:$0xf]
      %v688 = vld [vmem:[%s6 + $0x30] sm:$0xf]
      %v689 = vld [vmem:[%s6 + $0x34] sm:$0xf]
      %v690 = vld [vmem:[%s6 + $0x38] sm:$0xf]
      %v691 = vld [vmem:[%s6 + $0x3c] sm:$0xf]
      %v708 = vunpack.c.l.b16 %v676
      %v709 = vunpack.c.l.b16 %v677
      %v710 = vunpack.c.l.b16 %v678
      %v711 = vunpack.c.l.b16 %v679
      %v712 = vunpack.c.l.b16 %v680
      %v713 = vunpack.c.l.b16 %v681
      %v714 = vunpack.c.l.b16 %v682
      %v715 = vunpack.c.l.b16 %v683
      %v716 = vunpack.c.l.b16 %v684
      %v717 = vunpack.c.l.b16 %v685
      %v718 = vunpack.c.l.b16 %v686
      %v719 = vunpack.c.l.b16 %v687
      %v720 = vunpack.c.l.b16 %v688
      %v721 = vunpack.c.l.b16 %v689
      %v722 = vunpack.c.l.b16 %v690
      %v723 = vunpack.c.l.b16 %v691
      %v724 = vpack.c.b16 %v709, %v708
      %v725 = vpack.c.b16 %v711, %v710
      %v726 = vpack.c.b16 %v713, %v712
      %v727 = vpack.c.b16 %v715, %v714
      %v728 = vpack.c.b16 %v717, %v716
      %v729 = vpack.c.b16 %v719, %v718
      %v730 = vpack.c.b16 %v721, %v720
      %v731 = vpack.c.b16 %v723, %v722
      %740 = vmatprep.subr.bf16.mxu0 0
      %741 = vmatpush1.bf16.msra.mxu0 %v731
      %742 = vmatprep.subr.bf16.mxu0 0
      %743 = vmatpush1.bf16.msra.mxu0 %v730
      %744 = vmatprep.subr.bf16.mxu0 0
      %745 = vmatpush1.bf16.msra.mxu0 %v729
      %746 = vmatprep.subr.bf16.mxu0 0
      %747 = vmatpush1.bf16.msra.mxu0 %v728
      %748 = vmatprep.subr.bf16.mxu0 0
      %749 = vmatpush1.bf16.msra.mxu0 %v727
      %750 = vmatprep.subr.bf16.mxu0 0
      %751 = vmatpush1.bf16.msra.mxu0 %v726
      %752 = vmatprep.subr.bf16.mxu0 0
      %753 = vmatpush1.bf16.msra.mxu0 %v725
      %754 = vmatprep.subr.bf16.mxu0 0
      %755 = vmatpush1.bf16.msra.mxu0 %v724
      %756 = vmatprep.subr.bf16.mxu0 0
      %757 = vmatpush2.bf16.msra.mxu0 0
      %758 = vmatprep.subr.bf16.mxu0 0
      %759 = vmatpush2.bf16.msra.mxu0 0
      %760 = vmatprep.subr.bf16.mxu0 0
      %761 = vmatpush2.bf16.msra.mxu0 0
      %762 = vmatprep.subr.bf16.mxu0 0
      %763 = vmatpush2.bf16.msra.mxu0 0
      %764 = vmatprep.subr.bf16.mxu0 0
      %765 = vmatpush2.bf16.msra.mxu0 0
      %766 = vmatprep.subr.bf16.mxu0 0
      %767 = vmatpush2.bf16.msra.mxu0 0
      %768 = vmatprep.subr.bf16.mxu0 0
      %769 = vmatpush2.bf16.msra.mxu0 0
      %770 = vmatprep.subr.bf16.mxu0 0
      %771 = vmatpush2.bf16.msra.mxu0 0
      %772 = vmatprep.mubr.bf16.mxu0 0
      %773 = vmatmul.mubr.bf16.gmra.mxu0 %v674
      %v774 = vpop.f32.mrf.mxu0
      %v775 = vadd.f32 0.0, %v774
      %v776 = vpop.f32.mrf.mxu0
      %v777 = vpop.f32.mrf.mxu0
      %v778 = vadd.f32 0.0, %v777
      %v779 = vpop.f32.mrf.mxu0
      %780 = vmatprep.mubr.bf16.mxu0 0
      %781 = vmatmul.mubr.bf16.gmra.mxu0 %v675
      %v782 = vpop.f32.mrf.mxu0
      %v783 = vadd.f32 0.0, %v782
      %v784 = vpop.f32.mrf.mxu0
      %v785 = vpop.f32.mrf.mxu0
      %v786 = vadd.f32 0.0, %v785
      %v787 = vpop.f32.mrf.mxu0
      %788 = vdwg.mxu0
      %v789 = vmax.f32 %v775, 0.0
      %v790 = vmax.f32 %v778, 0.0
      %v791 = vmax.f32 %v783, 0.0
      %v792 = vmax.f32 %v786, 0.0
      %v793 = vadd.f32 %v670, %v789
      %v794 = vadd.f32 %v671, %v790
      %v795 = vadd.f32 %v672, %v791
      %v796 = vadd.f32 %v673, %v792
      %797 = vst [vmem:[%s280] sm:$0xff] %v793
      %798 = vst [vmem:[%s280 + $0x8] sm:$0xff] %v794
      %799 = vst [vmem:[%s280 + $0x10] sm:$0xff] %v795
      %800 = vst [vmem:[%s280 + $0x18] sm:$0xff] %v796
      %s801 = smul.u32 4, %s18
      %p802 = scmp.lt.s32.totalorder %s801, 7
      %s803 = scalar_select %p802, %s801, 7
      %s804 = smul.addr %s803, 8
      %s805 = scalar_lea.vmem %s7, %s804
      // Predicated region
      $region49: #{mlp_forward.1} parent=47 // pred_check
        %p806 = pneg %p188
      $region50: #{mlp_forward.1} parent=47 // pred_check_branch
        %808 = sbr.rel (%p806) target = $region52
      $region51: #{mlp_forward.1} parent=47 // pred_region
        %s809 = smul.u32 4, %s18
      $region52: #{mlp_forward.1} parent=47 // pred_fallthru
        _
    $region48: #{mlp_forward.1} parent=5 // pred_fallthru
      _
    %p810 = scmp.le.s32.totalorder 2, %s13
    // Predicated region
    $region53: #{mlp_forward.1} parent=5 // pred_check
      %p811 = pneg %p810
    $region54: #{mlp_forward.1} parent=5 // pred_check_branch
      %813 = sbr.rel (%p811) target = $region56
    $region55: #{mlp_forward.1} parent=5 // pred_region
      %s814 = ssub.s32 %s13, 2
      // Predicated region
      $region57: #{mlp_forward.1} parent=55 // pred_check
        %p815 = pneg %p194
      $region58: #{mlp_forward.1} parent=55 // pred_check_branch
        %817 = sbr.rel (%p815) target = $region60
      $region59: #{mlp_forward.1} parent=55 // pred_region
        %s818 = smul.u32 4, %s19
        %p819 = scmp.lt.s32.totalorder %s818, 7
        %s820 = scalar_select %p819, %s818, 7
        %s821 = smul.addr %s820, 8
        %s822 = scalar_lea.vmem %s7, %s821
      $region60: #{mlp_forward.1} parent=55 // pred_fallthru
        _
    $region56: #{mlp_forward.1} parent=5 // pred_fallthru
      _
  $region6: #{mlp_forward.1} parent=0 // loop_footer
    %s17 = sadd.s32 1, %s13
  $region7: #{mlp_forward.1} parent=0 // loop_footer_branch
    %12 = sbr.rel target = $region3
  $region8: #{mlp_forward.1} parent=0 // loop_exit
    _

</llo_original>
